<compile_context>
chip_gen: v6e
topology: v6e:2x2x1
jax: 0.10.0
libtpu: 0.0.40
codegen_flags: <defaults>
</compile_context>

<pallas_src>
import math
import numpy as np
import jax
import jax.numpy as jnp
from jax.experimental import pallas as pl
from jax.experimental.pallas import tpu as pltpu


def model_bilinear_kernel(x_ref, w0b0_ref, w1b1_ref, wall_ref, ball_ref, wfbf_ref, out_ref):
    """Fused forward: trunk MLP + per-SDN heads + final classifier.

    x_ref    : (TB, 2)
    w0b0_ref : (3, F)        rows 0-1 = fc0 weight, row 2 = fc0 bias
    w1b1_ref : (F+1, F)      rows 0..F-1 = fc1 weight, row F = fc1 bias
    wall_ref : (S, F, C+F)   block i: [:, :C] internal classifier, [:, C:] init_layer
    ball_ref : (S, 1, C+F)   matching biases
    wfbf_ref : (F+1, C)      rows 0..F-1 = final-layer weight, row F = final-layer bias
    out_ref  : (TB, P)       lane-dense slab (P multiple of 128); head i lives in
                             columns [i*C, (i+1)*C); columns >= (S+1)*C are padding.
    """
    F = w1b1_ref.shape[1]
    S = wall_ref.shape[0]
    C = wfbf_ref.shape[1]

    # Deterministic padding lanes (they are sliced off in the wrapper); one cheap
    # full-lane store, fully hidden under the serial matmul chain.
    out_ref[...] = jnp.zeros_like(out_ref)

    x = x_ref[...].astype(jnp.float32)

    # fc0: K=2 -> two rank-1 VPU FMAs, skip a near-empty MXU pass entirely.
    w0b0 = w0b0_ref[...]
    h = jnp.maximum(
        x[:, 0:1] * w0b0[0:1, :] + x[:, 1:2] * w0b0[1:2, :] + w0b0[2:3, :], 0.0)

    # fc1 on the MXU.
    w1b1 = w1b1_ref[...]
    h = jnp.maximum(
        jnp.dot(h, w1b1[:F, :], preferred_element_type=jnp.float32) + w1b1[F:F + 1, :],
        0.0)

    def softmax_and_store(logits, head_idx):
        # exact, numerically stable softmax; streamed straight into the output slab
        logits = logits - jnp.max(logits, axis=-1, keepdims=True)
        e = jnp.exp(logits)
        p = e * pl.reciprocal(jnp.sum(e, axis=-1, keepdims=True), approx=False)
        out_ref[:, head_idx * C:(head_idx + 1) * C] = p

    # SDN blocks: classifier + init_layer fused into ONE matmul per block (weights were
    # pre-concatenated to (F, C+F)). The chain is inherently serial -> static unroll.
    for i in range(S):
        z = (jnp.dot(h, wall_ref[i], preferred_element_type=jnp.float32) + ball_ref[i])
        softmax_and_store(z[:, :C], i)
        h = jnp.maximum(z[:, C:], 0.0)

    # Final classifier: its own slim (F, C) matmul (no (F, F) zero padding).
    wfbf = wfbf_ref[...]
    zf = jnp.dot(h, wfbf[:F, :], preferred_element_type=jnp.float32) + wfbf[F:F + 1, :]
    softmax_and_store(zf, S)


def pack_params(params, param_dtype=jnp.float32):
    """One-time parameter packing (call at model setup, NOT per forward call).

    param_dtype=jnp.bfloat16 halves weight DMA/VMEM and doubles MXU throughput on
    v6e/v7x for large F, but relaxes achievable tolerance (~1e-2/1e-3)."""
    (w0, b0, w1, b1, wc, bc, wl, bl, wf, bf) = params
    w0b0 = jnp.concatenate([w0, b0], axis=0)        # (3, F)
    w1b1 = jnp.concatenate([w1, b1], axis=0)        # (F+1, F)
    wall = jnp.concatenate([wc, wl], axis=-1)       # (S, F, C+F)
    ball = jnp.concatenate([bc, bl], axis=-1)       # (S, 1, C+F)
    wfbf = jnp.concatenate([wf, bf], axis=0)        # (F+1, C)
    return tuple(a.astype(param_dtype) for a in (w0b0, w1b1, wall, ball, wfbf))


def _pick_batch_tile(B, cap=1024):
    """Batch-tile policy.

    Small B: one grid step (the kernel is latency/overhead-bound; extra steps only add
    ~0.35 us each). Large B: largest multiple-of-8 divisor of B that is <= cap and leaves
    >= 2 grid steps, so the "parallel" batch axis can occupy both v7x TensorCores while
    still amortizing per-step overhead. Per-step VMEM stays tiny (tb*P*4B ~ 0.5 MiB at
    tb=1024), far inside every generation's scoped-VMEM default."""
    if B <= 256:
        return B
    t = min(cap, B // 2)
    t -= t % 8
    while t >= 8:
        if B % t == 0:
            return t
        t -= 8
    return B  # no multiple-of-8 divisor -> single full-batch step (block == full array)


def model_bilinear_forward(x, packed_params, *, tb=None):
    """Runs the fused Pallas kernel on pre-packed parameters. Returns a list of (B, C)
    softmax outputs, one per SDN block plus the final one (same ordering as PyTorch)."""
    w0b0, w1b1, wall, ball, wfbf = packed_params
    B = x.shape[0]
    S = wall.shape[0]
    C = wfbf.shape[1]
    n_heads = S + 1

    if tb is None:
        tb = _pick_batch_tile(B)
    assert B % tb == 0 and (tb == B or tb % 8 == 0), \
        "batch tile must divide B and be a multiple of 8 (or equal B)"

    # lane-dense padded output width (multiple of 128); heads are sliced back out below
    P = max(128, pl.cdiv(n_heads * C, 128) * 128)
    # TODO(synk): for very large B on v5e, a (n_heads*C, B)-transposed output layout would
    # cut the 8x-padded writeback bytes; not worth the in-kernel transposes at these sizes.

    def full_spec(arr):
        nd = arr.ndim
        return pl.BlockSpec(arr.shape, lambda i, _n=nd: (0,) * _n)

    out = pl.pallas_call(
        model_bilinear_kernel,
        out_shape=jax.ShapeDtypeStruct((B, P), jnp.float32),
        grid_spec=pltpu.PrefetchScalarGridSpec(
            num_scalar_prefetch=0,
            grid=(B // tb,),
            in_specs=[
                pl.BlockSpec((tb, x.shape[1]), lambda i: (i, 0)),   # x: tiled over batch
                full_spec(w0b0), full_spec(w1b1),
                full_spec(wall), full_spec(ball), full_spec(wfbf),
            ],
            out_specs=pl.BlockSpec((tb, P), lambda i: (i, 0)),
        ),
        compiler_params=pltpu.CompilerParams(dimension_semantics=("parallel",)),
    )(x, w0b0, w1b1, wall, ball, wfbf)

    return [out[:, i * C:(i + 1) * C] for i in range(n_heads)]


# ----------------------------------------------------------------------------
# Deterministic parameter construction (PyTorch nn.Linear-style uniform init).
# Weights are stored already transposed: (in_features, out_features).
# ----------------------------------------------------------------------------
def make_linear(key, in_f, out_f):
    kw, kb = jax.random.split(key)
    bound = 1.0 / math.sqrt(in_f)
    w = jax.random.uniform(kw, (in_f, out_f), jnp.float32, -bound, bound)
    b = jax.random.uniform(kb, (1, out_f), jnp.float32, -bound, bound)
    return w, b


def make_params(key, features, num_sdns, num_classes):
    keys = jax.random.split(key, 3 + 2 * num_sdns)
    w0, b0 = make_linear(keys[0], 2, features)
    w1, b1 = make_linear(keys[1], features, features)
    wcs, bcs, wls, bls = [], [], [], []
    for i in range(num_sdns):
        wl_i, bl_i = make_linear(keys[2 + 2 * i], features, features)      # _init_layer
        wc_i, bc_i = make_linear(keys[3 + 2 * i], features, num_classes)   # _internal_classifier
        wls.append(wl_i); bls.append(bl_i); wcs.append(wc_i); bcs.append(bc_i)
    wf, bf = make_linear(keys[2 + 2 * num_sdns], features, num_classes)
    wc = jnp.stack(wcs); bc = jnp.stack(bcs)
    wl = jnp.stack(wls); bl = jnp.stack(bls)
    return (w0, b0, w1, b1, wc, bc, wl, bl, wf, bf)


def reference_forward(x, params):
    """Pure-JAX reference mirroring the PyTorch module, for correctness check."""
    (w0, b0, w1, b1, wc, bc, wl, bl, wf, bf) = params
    outs = []
    h = jax.nn.relu(x @ w0 + b0)
    h = jax.nn.relu(h @ w1 + b1)
    for i in range(wc.shape[0]):
        outs.append(jax.nn.softmax(h @ wc[i] + bc[i], axis=1))
        h = jax.nn.relu(h @ wl[i] + bl[i])
    outs.append(jax.nn.softmax(h @ wf + bf, axis=1))
    return outs


if __name__ == "__main__":
    FEATURES, NUM_SDNS, NUM_CLASSES = 32, 3, 4

    key = jax.random.PRNGKey(0)
    kx, kp = jax.random.split(key)
    params = make_params(kp, FEATURES, NUM_SDNS, NUM_CLASSES)
    packed = pack_params(params)                      # packed ONCE, outside the call path

    fwd = jax.jit(model_bilinear_forward, static_argnames=("tb",))

    # Small batch: single grid step (latency regime).
    B = 16
    x = jax.random.normal(kx, (B, 2), jnp.float32)
    outputs = jax.block_until_ready(fwd(x, packed))
    for o, r in zip(outputs, reference_forward(x, params)):
        np.testing.assert_allclose(np.asarray(o), np.asarray(r), rtol=1e-5, atol=1e-5)

    # Larger batch: exercises the multi-step "parallel" batch grid (tb=256, 2 steps)
    # and the streamed head stores at a bigger tile.
    B2 = 512
    x2 = jax.random.normal(kx, (B2, 2), jnp.float32)
    outputs2 = jax.block_until_ready(fwd(x2, packed))
    for o, r in zip(outputs2, reference_forward(x2, params)):
        np.testing.assert_allclose(np.asarray(o), np.asarray(r), rtol=1e-5, atol=1e-5)

    print("KERNEL_OK")
</pallas_src>

<mosaic_0001>
module attributes {stable_mosaic.version = 11 : i64} {
  func.func @model_bilinear_kernel(%arg0: i32, %arg1: memref<16x2xf32, #tpu.memory_space<vmem>>, %arg2: memref<3x32xf32, #tpu.memory_space<vmem>>, %arg3: memref<33x32xf32, #tpu.memory_space<vmem>>, %arg4: memref<3x32x36xf32, #tpu.memory_space<vmem>>, %arg5: memref<3x1x36xf32, #tpu.memory_space<vmem>>, %arg6: memref<33x4xf32, #tpu.memory_space<vmem>>, %arg7: memref<16x128xf32, #tpu.memory_space<vmem>>) attributes {dimension_semantics = [#tpu.dimension_semantics<parallel>], iteration_bounds = array<i64: 1>, scalar_prefetch = 0 : i64, scratch_operands = 0 : i64, tpu.core_type = #tpu.core_type<tc>, window_params = [{transform_indices = @transform_0, window_bounds = array<i64: 16, 2>}, {pipeline_mode = #tpu.pipeline_mode<synchronous>, transform_indices = @transform_1, window_bounds = array<i64: 3, 32>}, {pipeline_mode = #tpu.pipeline_mode<synchronous>, transform_indices = @transform_2, window_bounds = array<i64: 33, 32>}, {pipeline_mode = #tpu.pipeline_mode<synchronous>, transform_indices = @transform_3, window_bounds = array<i64: 3, 32, 36>}, {pipeline_mode = #tpu.pipeline_mode<synchronous>, transform_indices = @transform_4, window_bounds = array<i64: 3, 1, 36>}, {pipeline_mode = #tpu.pipeline_mode<synchronous>, transform_indices = @transform_5, window_bounds = array<i64: 33, 4>}, {transform_indices = @transform_6, window_bounds = array<i64: 16, 128>}]} {
    %cst = arith.constant 0.000000e+00 : f32
    %0 = vector.broadcast %cst : f32 to vector<16x128xf32>
    %c0 = arith.constant 0 : index
    %c0_0 = arith.constant 0 : index
    %1 = vector.load %arg7[%c0, %c0_0] : memref<16x128xf32, #tpu.memory_space<vmem>>, vector<16x128xf32>
    tpu.vector_store %arg7[%c0, %c0_0], %0 {strides = array<i32>} : memref<16x128xf32, #tpu.memory_space<vmem>>, vector<16x128xf32>,
    %c0_1 = arith.constant 0 : index
    %c0_2 = arith.constant 0 : index
    %2 = vector.load %arg1[%c0_1, %c0_2] : memref<16x2xf32, #tpu.memory_space<vmem>>, vector<16x2xf32>
    %c0_3 = arith.constant 0 : index
    %c0_4 = arith.constant 0 : index
    %3 = vector.load %arg2[%c0_3, %c0_4] : memref<3x32xf32, #tpu.memory_space<vmem>>, vector<3x32xf32>
    %4 = vector.extract_strided_slice %2 {offsets = [0, 0], sizes = [16, 1], strides = [1, 1]} : vector<16x2xf32> to vector<16x1xf32>
    %5 = vector.extract_strided_slice %3 {offsets = [0, 0], sizes = [1, 32], strides = [1, 1]} : vector<3x32xf32> to vector<1x32xf32>
    %6 = vector.broadcast %4 : vector<16x1xf32> to vector<16x32xf32>
    %7 = vector.broadcast %5 : vector<1x32xf32> to vector<16x32xf32>
    %8 = arith.mulf %6, %7 : vector<16x32xf32>
    %9 = vector.extract_strided_slice %2 {offsets = [0, 1], sizes = [16, 1], strides = [1, 1]} : vector<16x2xf32> to vector<16x1xf32>
    %10 = vector.extract_strided_slice %3 {offsets = [1, 0], sizes = [1, 32], strides = [1, 1]} : vector<3x32xf32> to vector<1x32xf32>
    %11 = vector.broadcast %9 : vector<16x1xf32> to vector<16x32xf32>
    %12 = vector.broadcast %10 : vector<1x32xf32> to vector<16x32xf32>
    %13 = arith.mulf %11, %12 : vector<16x32xf32>
    %14 = arith.addf %8, %13 : vector<16x32xf32>
    %15 = vector.extract_strided_slice %3 {offsets = [2, 0], sizes = [1, 32], strides = [1, 1]} : vector<3x32xf32> to vector<1x32xf32>
    %16 = vector.broadcast %15 : vector<1x32xf32> to vector<16x32xf32>
    %17 = arith.addf %14, %16 : vector<16x32xf32>
    %cst_5 = arith.constant 0.000000e+00 : f32
    %18 = vector.broadcast %cst_5 : f32 to vector<16x32xf32>
    %19 = arith.maximumf %17, %18 : vector<16x32xf32>
    %c0_6 = arith.constant 0 : index
    %c0_7 = arith.constant 0 : index
    %20 = vector.load %arg3[%c0_6, %c0_7] : memref<33x32xf32, #tpu.memory_space<vmem>>, vector<33x32xf32>
    %21 = vector.extract_strided_slice %20 {offsets = [0, 0], sizes = [32, 32], strides = [1, 1]} : vector<33x32xf32> to vector<32x32xf32>
    %cst_8 = arith.constant dense<0.000000e+00> : vector<16x32xf32>
    %22 = tpu.matmul %19, %21, %cst_8 {dimension_numbers = #tpu.dot_dimension_numbers<[1], [0], [0], [1], [0, 0, 1, 1], [], []>} : vector<16x32xf32>, vector<32x32xf32>, vector<16x32xf32> -> vector<16x32xf32>
    %23 = vector.extract_strided_slice %20 {offsets = [32, 0], sizes = [1, 32], strides = [1, 1]} : vector<33x32xf32> to vector<1x32xf32>
    %24 = vector.broadcast %23 : vector<1x32xf32> to vector<16x32xf32>
    %25 = arith.addf %22, %24 : vector<16x32xf32>
    %cst_9 = arith.constant 0.000000e+00 : f32
    %26 = vector.broadcast %cst_9 : f32 to vector<16x32xf32>
    %27 = arith.maximumf %25, %26 : vector<16x32xf32>
    %c0_10 = arith.constant 0 : index
    %c0_11 = arith.constant 0 : index
    %c0_12 = arith.constant 0 : index
    %28 = vector.load %arg4[%c0_10, %c0_11, %c0_12] : memref<3x32x36xf32, #tpu.memory_space<vmem>>, vector<1x32x36xf32>
    %29 = vector.shape_cast %28 : vector<1x32x36xf32> to vector<32x36xf32>
    %cst_13 = arith.constant dense<0.000000e+00> : vector<16x36xf32>
    %30 = tpu.matmul %27, %29, %cst_13 {dimension_numbers = #tpu.dot_dimension_numbers<[1], [0], [0], [1], [0, 0, 1, 1], [], []>} : vector<16x32xf32>, vector<32x36xf32>, vector<16x36xf32> -> vector<16x36xf32>
    %c0_14 = arith.constant 0 : index
    %c0_15 = arith.constant 0 : index
    %c0_16 = arith.constant 0 : index
    %31 = vector.load %arg5[%c0_14, %c0_15, %c0_16] : memref<3x1x36xf32, #tpu.memory_space<vmem>>, vector<1x1x36xf32>
    %32 = vector.shape_cast %31 : vector<1x1x36xf32> to vector<1x36xf32>
    %33 = vector.broadcast %32 : vector<1x36xf32> to vector<16x36xf32>
    %34 = arith.addf %30, %33 : vector<16x36xf32>
    %35 = vector.extract_strided_slice %34 {offsets = [0, 0], sizes = [16, 4], strides = [1, 1]} : vector<16x36xf32> to vector<16x4xf32>
    %cst_17 = arith.constant dense<0xFF800000> : vector<16xf32>
    %36 = vector.multi_reduction <maximumf>, %35, %cst_17 [1] : vector<16x4xf32> to vector<16xf32>
    %37 = vector.shape_cast %36 : vector<16xf32> to vector<16x1xf32>
    %38 = vector.broadcast %37 : vector<16x1xf32> to vector<16x4xf32>
    %39 = arith.subf %35, %38 : vector<16x4xf32>
    %40 = math.exp %39 : vector<16x4xf32>
    %cst_18 = arith.constant dense<0.000000e+00> : vector<16xf32>
    %41 = vector.multi_reduction <add>, %40, %cst_18 [1] : vector<16x4xf32> to vector<16xf32>
    %42 = vector.shape_cast %41 : vector<16xf32> to vector<16x1xf32>
    %43 = tpu.reciprocal %42 : vector<16x1xf32> -> vector<16x1xf32>
    %44 = vector.broadcast %43 : vector<16x1xf32> to vector<16x4xf32>
    %45 = arith.mulf %40, %44 : vector<16x4xf32>
    %c0_19 = arith.constant 0 : index
    %c0_20 = arith.constant 0 : index
    %46 = vector.load %arg7[%c0_19, %c0_20] : memref<16x128xf32, #tpu.memory_space<vmem>>, vector<16x4xf32>
    tpu.vector_store %arg7[%c0_19, %c0_20], %45 {strides = array<i32>} : memref<16x128xf32, #tpu.memory_space<vmem>>, vector<16x4xf32>,
    %47 = vector.extract_strided_slice %34 {offsets = [0, 4], sizes = [16, 32], strides = [1, 1]} : vector<16x36xf32> to vector<16x32xf32>
    %cst_21 = arith.constant 0.000000e+00 : f32
    %48 = vector.broadcast %cst_21 : f32 to vector<16x32xf32>
    %49 = arith.maximumf %47, %48 : vector<16x32xf32>
    %c1 = arith.constant 1 : index
    %c0_22 = arith.constant 0 : index
    %c0_23 = arith.constant 0 : index
    %50 = vector.load %arg4[%c1, %c0_22, %c0_23] : memref<3x32x36xf32, #tpu.memory_space<vmem>>, vector<1x32x36xf32>
    %51 = vector.shape_cast %50 : vector<1x32x36xf32> to vector<32x36xf32>
    %cst_24 = arith.constant dense<0.000000e+00> : vector<16x36xf32>
    %52 = tpu.matmul %49, %51, %cst_24 {dimension_numbers = #tpu.dot_dimension_numbers<[1], [0], [0], [1], [0, 0, 1, 1], [], []>} : vector<16x32xf32>, vector<32x36xf32>, vector<16x36xf32> -> vector<16x36xf32>
    %c1_25 = arith.constant 1 : index
    %c0_26 = arith.constant 0 : index
    %c0_27 = arith.constant 0 : index
    %53 = vector.load %arg5[%c1_25, %c0_26, %c0_27] : memref<3x1x36xf32, #tpu.memory_space<vmem>>, vector<1x1x36xf32>
    %54 = vector.shape_cast %53 : vector<1x1x36xf32> to vector<1x36xf32>
    %55 = vector.broadcast %54 : vector<1x36xf32> to vector<16x36xf32>
    %56 = arith.addf %52, %55 : vector<16x36xf32>
    %57 = vector.extract_strided_slice %56 {offsets = [0, 0], sizes = [16, 4], strides = [1, 1]} : vector<16x36xf32> to vector<16x4xf32>
    %cst_28 = arith.constant dense<0xFF800000> : vector<16xf32>
    %58 = vector.multi_reduction <maximumf>, %57, %cst_28 [1] : vector<16x4xf32> to vector<16xf32>
    %59 = vector.shape_cast %58 : vector<16xf32> to vector<16x1xf32>
    %60 = vector.broadcast %59 : vector<16x1xf32> to vector<16x4xf32>
    %61 = arith.subf %57, %60 : vector<16x4xf32>
    %62 = math.exp %61 : vector<16x4xf32>
    %cst_29 = arith.constant dense<0.000000e+00> : vector<16xf32>
    %63 = vector.multi_reduction <add>, %62, %cst_29 [1] : vector<16x4xf32> to vector<16xf32>
    %64 = vector.shape_cast %63 : vector<16xf32> to vector<16x1xf32>
    %65 = tpu.reciprocal %64 : vector<16x1xf32> -> vector<16x1xf32>
    %66 = vector.broadcast %65 : vector<16x1xf32> to vector<16x4xf32>
    %67 = arith.mulf %62, %66 : vector<16x4xf32>
    %c0_30 = arith.constant 0 : index
    %c4 = arith.constant 4 : index
    %68 = vector.load %arg7[%c0_30, %c4] : memref<16x128xf32, #tpu.memory_space<vmem>>, vector<16x4xf32>
    tpu.vector_store %arg7[%c0_30, %c4], %67 {strides = array<i32>} : memref<16x128xf32, #tpu.memory_space<vmem>>, vector<16x4xf32>,
    %69 = vector.extract_strided_slice %56 {offsets = [0, 4], sizes = [16, 32], strides = [1, 1]} : vector<16x36xf32> to vector<16x32xf32>
    %cst_31 = arith.constant 0.000000e+00 : f32
    %70 = vector.broadcast %cst_31 : f32 to vector<16x32xf32>
    %71 = arith.maximumf %69, %70 : vector<16x32xf32>
    %c2 = arith.constant 2 : index
    %c0_32 = arith.constant 0 : index
    %c0_33 = arith.constant 0 : index
    %72 = vector.load %arg4[%c2, %c0_32, %c0_33] : memref<3x32x36xf32, #tpu.memory_space<vmem>>, vector<1x32x36xf32>
    %73 = vector.shape_cast %72 : vector<1x32x36xf32> to vector<32x36xf32>
    %cst_34 = arith.constant dense<0.000000e+00> : vector<16x36xf32>
    %74 = tpu.matmul %71, %73, %cst_34 {dimension_numbers = #tpu.dot_dimension_numbers<[1], [0], [0], [1], [0, 0, 1, 1], [], []>} : vector<16x32xf32>, vector<32x36xf32>, vector<16x36xf32> -> vector<16x36xf32>
    %c2_35 = arith.constant 2 : index
    %c0_36 = arith.constant 0 : index
    %c0_37 = arith.constant 0 : index
    %75 = vector.load %arg5[%c2_35, %c0_36, %c0_37] : memref<3x1x36xf32, #tpu.memory_space<vmem>>, vector<1x1x36xf32>
    %76 = vector.shape_cast %75 : vector<1x1x36xf32> to vector<1x36xf32>
    %77 = vector.broadcast %76 : vector<1x36xf32> to vector<16x36xf32>
    %78 = arith.addf %74, %77 : vector<16x36xf32>
    %79 = vector.extract_strided_slice %78 {offsets = [0, 0], sizes = [16, 4], strides = [1, 1]} : vector<16x36xf32> to vector<16x4xf32>
    %cst_38 = arith.constant dense<0xFF800000> : vector<16xf32>
    %80 = vector.multi_reduction <maximumf>, %79, %cst_38 [1] : vector<16x4xf32> to vector<16xf32>
    %81 = vector.shape_cast %80 : vector<16xf32> to vector<16x1xf32>
    %82 = vector.broadcast %81 : vector<16x1xf32> to vector<16x4xf32>
    %83 = arith.subf %79, %82 : vector<16x4xf32>
    %84 = math.exp %83 : vector<16x4xf32>
    %cst_39 = arith.constant dense<0.000000e+00> : vector<16xf32>
    %85 = vector.multi_reduction <add>, %84, %cst_39 [1] : vector<16x4xf32> to vector<16xf32>
    %86 = vector.shape_cast %85 : vector<16xf32> to vector<16x1xf32>
    %87 = tpu.reciprocal %86 : vector<16x1xf32> -> vector<16x1xf32>
    %88 = vector.broadcast %87 : vector<16x1xf32> to vector<16x4xf32>
    %89 = arith.mulf %84, %88 : vector<16x4xf32>
    %c0_40 = arith.constant 0 : index
    %c8 = arith.constant 8 : index
    %90 = vector.load %arg7[%c0_40, %c8] : memref<16x128xf32, #tpu.memory_space<vmem>>, vector<16x4xf32>
    tpu.vector_store %arg7[%c0_40, %c8], %89 {strides = array<i32>} : memref<16x128xf32, #tpu.memory_space<vmem>>, vector<16x4xf32>,
    %91 = vector.extract_strided_slice %78 {offsets = [0, 4], sizes = [16, 32], strides = [1, 1]} : vector<16x36xf32> to vector<16x32xf32>
    %cst_41 = arith.constant 0.000000e+00 : f32
    %92 = vector.broadcast %cst_41 : f32 to vector<16x32xf32>
    %93 = arith.maximumf %91, %92 : vector<16x32xf32>
    %c0_42 = arith.constant 0 : index
    %c0_43 = arith.constant 0 : index
    %94 = vector.load %arg6[%c0_42, %c0_43] : memref<33x4xf32, #tpu.memory_space<vmem>>, vector<33x4xf32>
    %95 = vector.extract_strided_slice %94 {offsets = [0, 0], sizes = [32, 4], strides = [1, 1]} : vector<33x4xf32> to vector<32x4xf32>
    %cst_44 = arith.constant dense<0.000000e+00> : vector<16x4xf32>
    %96 = tpu.matmul %93, %95, %cst_44 {dimension_numbers = #tpu.dot_dimension_numbers<[1], [0], [0], [1], [0, 0, 1, 1], [], []>} : vector<16x32xf32>, vector<32x4xf32>, vector<16x4xf32> -> vector<16x4xf32>
    %97 = vector.extract_strided_slice %94 {offsets = [32, 0], sizes = [1, 4], strides = [1, 1]} : vector<33x4xf32> to vector<1x4xf32>
    %98 = vector.broadcast %97 : vector<1x4xf32> to vector<16x4xf32>
    %99 = arith.addf %96, %98 : vector<16x4xf32>
    %cst_45 = arith.constant dense<0xFF800000> : vector<16xf32>
    %100 = vector.multi_reduction <maximumf>, %99, %cst_45 [1] : vector<16x4xf32> to vector<16xf32>
    %101 = vector.shape_cast %100 : vector<16xf32> to vector<16x1xf32>
    %102 = vector.broadcast %101 : vector<16x1xf32> to vector<16x4xf32>
    %103 = arith.subf %99, %102 : vector<16x4xf32>
    %104 = math.exp %103 : vector<16x4xf32>
    %cst_46 = arith.constant dense<0.000000e+00> : vector<16xf32>
    %105 = vector.multi_reduction <add>, %104, %cst_46 [1] : vector<16x4xf32> to vector<16xf32>
    %106 = vector.shape_cast %105 : vector<16xf32> to vector<16x1xf32>
    %107 = tpu.reciprocal %106 : vector<16x1xf32> -> vector<16x1xf32>
    %108 = vector.broadcast %107 : vector<16x1xf32> to vector<16x4xf32>
    %109 = arith.mulf %104, %108 : vector<16x4xf32>
    %c0_47 = arith.constant 0 : index
    %c12 = arith.constant 12 : index
    %110 = vector.load %arg7[%c0_47, %c12] : memref<16x128xf32, #tpu.memory_space<vmem>>, vector<16x4xf32>
    tpu.vector_store %arg7[%c0_47, %c12], %109 {strides = array<i32>} : memref<16x128xf32, #tpu.memory_space<vmem>>, vector<16x4xf32>,
    return
  }
  func.func @transform_0(%arg0: i32) -> (i32, i32) {
    %c0_i32 = arith.constant 0 : i32
    %c0_i32_0 = arith.constant 0 : i32
    return %arg0, %c0_i32 : i32, i32
  }
  func.func @transform_1(%arg0: i32) -> (i32, i32) {
    %c0_i32 = arith.constant 0 : i32
    %c0_i32_0 = arith.constant 0 : i32
    %c0_i32_1 = arith.constant 0 : i32
    return %c0_i32, %c0_i32_0 : i32, i32
  }
  func.func @transform_2(%arg0: i32) -> (i32, i32) {
    %c0_i32 = arith.constant 0 : i32
    %c0_i32_0 = arith.constant 0 : i32
    %c0_i32_1 = arith.constant 0 : i32
    return %c0_i32, %c0_i32_0 : i32, i32
  }
  func.func @transform_3(%arg0: i32) -> (i32, i32, i32) {
    %c0_i32 = arith.constant 0 : i32
    %c0_i32_0 = arith.constant 0 : i32
    %c0_i32_1 = arith.constant 0 : i32
    %c0_i32_2 = arith.constant 0 : i32
    return %c0_i32, %c0_i32_0, %c0_i32_1 : i32, i32, i32
  }
  func.func @transform_4(%arg0: i32) -> (i32, i32, i32) {
    %c0_i32 = arith.constant 0 : i32
    %c0_i32_0 = arith.constant 0 : i32
    %c0_i32_1 = arith.constant 0 : i32
    %c0_i32_2 = arith.constant 0 : i32
    return %c0_i32, %c0_i32_0, %c0_i32_1 : i32, i32, i32
  }
  func.func @transform_5(%arg0: i32) -> (i32, i32) {
    %c0_i32 = arith.constant 0 : i32
    %c0_i32_0 = arith.constant 0 : i32
    %c0_i32_1 = arith.constant 0 : i32
    return %c0_i32, %c0_i32_0 : i32, i32
  }
  func.func @transform_6(%arg0: i32) -> (i32, i32) {
    %c0_i32 = arith.constant 0 : i32
    %c0_i32_0 = arith.constant 0 : i32
    return %arg0, %c0_i32 : i32, i32
  }
}

</mosaic_0001>

<llo_original>
// kernel: model_bilinear_forward.1
$region0: #{model_bilinear_forward.1}
  #allocation0 [shape = 'u32[]', space=smem, size = 0x4, offset = 0x4, fixed_abs, tag = 'smem constant byte address 0x4 - core index']
  #allocation1 [shape = 'u32[144,128]{1,0:T(1,128)}', space=vmem, size = 0x12000, scoped, tag = 'internal scratch']
  %s0 = inlined_call_operand.vmem [shape: f32[16,2], index: 0, kind: input, shape index: {}]
  %s1 = inlined_call_operand.vmem [shape: f32[3,32], index: 1, kind: input, shape index: {}]
  %s2 = inlined_call_operand.vmem [shape: f32[33,32], index: 2, kind: input, shape index: {}]
  %s3 = inlined_call_operand.vmem [shape: f32[3,32,36], index: 3, kind: input, shape index: {}]
  %s4 = inlined_call_operand.vmem [shape: f32[3,1,36], index: 4, kind: input, shape index: {}]
  %s5 = inlined_call_operand.vmem [shape: f32[33,4], index: 5, kind: input, shape index: {}]
  %s6 = inlined_call_operand.vmem [shape: f32[16,128], index: 6, kind: output, shape index: {}]
  %s7 = sld [smem:[#allocation0]]
  $region34: #{model_bilinear_forward.1} parent=0
    _
  %s9 = ssub.s32 1, %s7
  %s10 = scalar_select 0, %s9, %s7
  // Predicated region
  $region2: #{model_bilinear_forward.1} parent=0 // pred_check
    _
  $region3: #{model_bilinear_forward.1} parent=0 // pred_check_branch
    %12 = sbr.rel (0) target = $region5
  $region4: #{model_bilinear_forward.1} parent=0 // pred_region
    _
  $region5: #{model_bilinear_forward.1} parent=0 // pred_fallthru
    _
  // Predicated region
  $region6: #{model_bilinear_forward.1} parent=0 // pred_check
    _
  $region7: #{model_bilinear_forward.1} parent=0 // pred_check_branch
    %14 = sbr.rel (0) target = $region9
  $region8: #{model_bilinear_forward.1} parent=0 // pred_region
    _
  $region9: #{model_bilinear_forward.1} parent=0 // pred_fallthru
    _
  // Predicated region
  $region10: #{model_bilinear_forward.1} parent=0 // pred_check
    _
  $region11: #{model_bilinear_forward.1} parent=0 // pred_check_branch
    %16 = sbr.rel (0) target = $region13
  $region12: #{model_bilinear_forward.1} parent=0 // pred_region
    _
  $region13: #{model_bilinear_forward.1} parent=0 // pred_fallthru
    _
  // Predicated region
  $region14: #{model_bilinear_forward.1} parent=0 // pred_check
    _
  $region15: #{model_bilinear_forward.1} parent=0 // pred_check_branch
    %18 = sbr.rel (0) target = $region17
  $region16: #{model_bilinear_forward.1} parent=0 // pred_region
    _
  $region17: #{model_bilinear_forward.1} parent=0 // pred_fallthru
    _
  // Predicated region
  $region18: #{model_bilinear_forward.1} parent=0 // pred_check
    _
  $region19: #{model_bilinear_forward.1} parent=0 // pred_check_branch
    %20 = sbr.rel (0) target = $region21
  $region20: #{model_bilinear_forward.1} parent=0 // pred_region
    _
  $region21: #{model_bilinear_forward.1} parent=0 // pred_fallthru
    _
  // Predicated region
  $region22: #{model_bilinear_forward.1} parent=0 // pred_check
    _
  $region23: #{model_bilinear_forward.1} parent=0 // pred_check_branch
    %22 = sbr.rel (0) target = $region25
  $region24: #{model_bilinear_forward.1} parent=0 // pred_region
    _
  $region25: #{model_bilinear_forward.1} parent=0 // pred_fallthru
    _
  %23 = vst [vmem:[%s6] sm:$0xff] 0.0
  %24 = vst [vmem:[%s6 + $0x8] sm:$0xff] 0.0
  %v25 = vld [vmem:[%s0] sm:$0xff]
  %v26 = vld [vmem:[%s0 + $0x8] sm:$0xff]
  %v27 = vld [vmem:[%s1] sm:$0x7]
  %29 = vset.pattern.permute.xlu0 0
  %30 = vperm.xlu0 %29, %v25
  %v31 = vpop.permute.xlu0 %30
  %34 = vset.pattern.permute.xlu0 0
  %35 = vperm.xlu0 %34, %v26
  %v36 = vpop.permute.xlu0 %35
  %v38 = vlaneseq
  %v39 = vshrl.u32 %v38, 7
  %v40 = vsub.s32 0, %v39
  %v41 = vrot.slane %v27, %v40
  %v42 = vmul.f32 %v31, %v41
  %v43 = vmul.f32 %v36, %v41
  %44 = vset.pattern.permute.xlu0 1
  %45 = vperm.xlu0 %44, %v25
  %v46 = vpop.permute.xlu0 %45
  %48 = vset.pattern.permute.xlu0 1
  %49 = vperm.xlu0 %48, %v26
  %v50 = vpop.permute.xlu0 %49
  %v52 = vlaneseq
  %v53 = vshrl.u32 %v52, 7
  %v54 = vsub.s32 1, %v53
  %v55 = vrot.slane %v27, %v54
  %v56 = vmul.f32 %v46, %v55
  %v57 = vmul.f32 %v50, %v55
  %v58 = vadd.f32 %v42, %v56
  %v59 = vadd.f32 %v43, %v57
  %v60 = vlaneseq
  %v61 = vshrl.u32 %v60, 7
  %v62 = vsub.s32 2, %v61
  %v63 = vrot.slane %v27, %v62
  %v64 = vadd.f32 %v58, %v63
  %v65 = vadd.f32 %v59, %v63
  %v66 = vmax.f32 %v64, 0.0
  %v67 = vmax.f32 %v65, 0.0
  %v68 = vld [vmem:[%s2] sm:$0xff]
  %v69 = vld [vmem:[%s2 + $0x8] sm:$0xff]
  %v70 = vld [vmem:[%s2 + $0x10] sm:$0xff]
  %v71 = vld [vmem:[%s2 + $0x18] sm:$0xff]
  %v72 = vld [vmem:[%s2 + $0x20] sm:$0x1]
  %v73 = vlaneseq
  %v74 = vshrl.u32 %v73, 7
  %v75 = vsub.s32 0, %v74
  %v76 = vrot.slane %v72, %v75
  %vm77 = vcmask 261120
  %v79 = vsel %vm77, %v66, 0
  %v82 = vsel %vm77, %v67, 0
  %84 = vmatprep.subr.mxu0 0.0
  %85 = vmatpush1.msra.mxu0 0.0
  %86 = vmatprep.subr.mxu0 0.0
  %87 = vmatpush1.msra.mxu0 0.0
  %88 = vmatprep.subr.mxu0 0.0
  %89 = vmatpush1.msra.mxu0 0.0
  %90 = vmatprep.subr.mxu0 0.0
  %91 = vmatpush1.msra.mxu0 0.0
  %92 = vmatprep.subr.mxu0 0.0
  %93 = vmatpush1.msra.mxu0 0.0
  %94 = vmatprep.subr.mxu0 0.0
  %95 = vmatpush1.msra.mxu0 0.0
  %96 = vmatprep.subr.mxu0 0.0
  %97 = vmatpush1.msra.mxu0 0.0
  %98 = vmatprep.subr.mxu0 0.0
  %99 = vmatpush1.msra.mxu0 0.0
  %100 = vmatprep.subr.mxu0 0.0
  %101 = vmatpush1.msra.mxu0 0.0
  %102 = vmatprep.subr.mxu0 0.0
  %103 = vmatpush1.msra.mxu0 0.0
  %104 = vmatprep.subr.mxu0 0.0
  %105 = vmatpush1.msra.mxu0 0.0
  %106 = vmatprep.subr.mxu0 0.0
  %107 = vmatpush1.msra.mxu0 0.0
  %108 = vmatprep.subr.mxu0 0.0
  %109 = vmatpush1.msra.mxu0 %v71
  %110 = vmatprep.subr.mxu0 0.0
  %111 = vmatpush1.msra.mxu0 %v70
  %112 = vmatprep.subr.mxu0 0.0
  %113 = vmatpush1.msra.mxu0 %v69
  %114 = vmatprep.subr.mxu0 0.0
  %115 = vmatpush1.msra.mxu0 %v68
  %116 = vmatprep.subr.mxu0 0.0
  %117 = vmatpush2.msra.mxu0 0.0
  %118 = vmatprep.subr.mxu0 0.0
  %119 = vmatpush2.msra.mxu0 0.0
  %120 = vmatprep.subr.mxu0 0.0
  %121 = vmatpush2.msra.mxu0 0.0
  %122 = vmatprep.subr.mxu0 0.0
  %123 = vmatpush2.msra.mxu0 0.0
  %124 = vmatprep.subr.mxu0 0.0
  %125 = vmatpush2.msra.mxu0 0.0
  %126 = vmatprep.subr.mxu0 0.0
  %127 = vmatpush2.msra.mxu0 0.0
  %128 = vmatprep.subr.mxu0 0.0
  %129 = vmatpush2.msra.mxu0 0.0
  %130 = vmatprep.subr.mxu0 0.0
  %131 = vmatpush2.msra.mxu0 0.0
  %132 = vmatprep.subr.mxu0 0.0
  %133 = vmatpush2.msra.mxu0 0.0
  %134 = vmatprep.subr.mxu0 0.0
  %135 = vmatpush2.msra.mxu0 0.0
  %136 = vmatprep.subr.mxu0 0.0
  %137 = vmatpush2.msra.mxu0 0.0
  %138 = vmatprep.subr.mxu0 0.0
  %139 = vmatpush2.msra.mxu0 0.0
  %140 = vmatprep.subr.mxu0 0.0
  %141 = vmatpush2.msra.mxu0 0.0
  %142 = vmatprep.subr.mxu0 0.0
  %143 = vmatpush2.msra.mxu0 0.0
  %144 = vmatprep.subr.mxu0 0.0
  %145 = vmatpush2.msra.mxu0 0.0
  %146 = vmatprep.subr.mxu0 0.0
  %147 = vmatpush2.msra.mxu0 0.0
  %148 = vmatprep.mubr.f32.mxu0 0.0
  %149 = vmatmul.mubr.f32.gmra.mxu0 %v79
  %v150 = vpop.f32.mrf.mxu0
  %v151 = vadd.f32 %v76, %v150
  %v152 = vpop.f32.mrf.mxu0
  %153 = vmatprep.mubr.f32.mxu0 0.0
  %154 = vmatmul.mubr.f32.gmra.mxu0 %v82
  %v155 = vpop.f32.mrf.mxu0
  %v156 = vadd.f32 %v76, %v155
  %v157 = vpop.f32.mrf.mxu0
  %158 = vdwg.mxu0
  %v159 = vmax.f32 %v151, 0.0
  %v160 = vmax.f32 %v156, 0.0
  %v161 = vld [vmem:[%s3] sm:$0xff]
  %v162 = vld [vmem:[%s3 + $0x8] sm:$0xff]
  %v163 = vld [vmem:[%s3 + $0x10] sm:$0xff]
  %v164 = vld [vmem:[%s3 + $0x18] sm:$0xff]
  %v165 = vld [vmem:[%s4] sm:$0x1]
  %v167 = vlaneseq
  %v168 = vshrl.u32 %v167, 7
  %v169 = vsub.s32 0, %v168
  %v170 = vrot.slane %v165, %v169
  %v173 = vsel %vm77, %v159, 0
  %v176 = vsel %vm77, %v160, 0
  %178 = vmatprep.subr.mxu0 0.0
  %179 = vmatpush1.msra.mxu0 0.0
  %180 = vmatprep.subr.mxu0 0.0
  %181 = vmatpush1.msra.mxu0 0.0
  %182 = vmatprep.subr.mxu0 0.0
  %183 = vmatpush1.msra.mxu0 0.0
  %184 = vmatprep.subr.mxu0 0.0
  %185 = vmatpush1.msra.mxu0 0.0
  %186 = vmatprep.subr.mxu0 0.0
  %187 = vmatpush1.msra.mxu0 0.0
  %188 = vmatprep.subr.mxu0 0.0
  %189 = vmatpush1.msra.mxu0 0.0
  %190 = vmatprep.subr.mxu0 0.0
  %191 = vmatpush1.msra.mxu0 0.0
  %192 = vmatprep.subr.mxu0 0.0
  %193 = vmatpush1.msra.mxu0 0.0
  %194 = vmatprep.subr.mxu0 0.0
  %195 = vmatpush1.msra.mxu0 0.0
  %196 = vmatprep.subr.mxu0 0.0
  %197 = vmatpush1.msra.mxu0 0.0
  %198 = vmatprep.subr.mxu0 0.0
  %199 = vmatpush1.msra.mxu0 0.0
  %200 = vmatprep.subr.mxu0 0.0
  %201 = vmatpush1.msra.mxu0 0.0
  %202 = vmatprep.subr.mxu0 0.0
  %203 = vmatpush1.msra.mxu0 %v164
  %204 = vmatprep.subr.mxu0 0.0
  %205 = vmatpush1.msra.mxu0 %v163
  %206 = vmatprep.subr.mxu0 0.0
  %207 = vmatpush1.msra.mxu0 %v162
  %208 = vmatprep.subr.mxu0 0.0
  %209 = vmatpush1.msra.mxu0 %v161
  %210 = vmatprep.subr.mxu0 0.0
  %211 = vmatpush2.msra.mxu0 0.0
  %212 = vmatprep.subr.mxu0 0.0
  %213 = vmatpush2.msra.mxu0 0.0
  %214 = vmatprep.subr.mxu0 0.0
  %215 = vmatpush2.msra.mxu0 0.0
  %216 = vmatprep.subr.mxu0 0.0
  %217 = vmatpush2.msra.mxu0 0.0
  %218 = vmatprep.subr.mxu0 0.0
  %219 = vmatpush2.msra.mxu0 0.0
  %220 = vmatprep.subr.mxu0 0.0
  %221 = vmatpush2.msra.mxu0 0.0
  %222 = vmatprep.subr.mxu0 0.0
  %223 = vmatpush2.msra.mxu0 0.0
  %224 = vmatprep.subr.mxu0 0.0
  %225 = vmatpush2.msra.mxu0 0.0
  %226 = vmatprep.subr.mxu0 0.0
  %227 = vmatpush2.msra.mxu0 0.0
  %228 = vmatprep.subr.mxu0 0.0
  %229 = vmatpush2.msra.mxu0 0.0
  %230 = vmatprep.subr.mxu0 0.0
  %231 = vmatpush2.msra.mxu0 0.0
  %232 = vmatprep.subr.mxu0 0.0
  %233 = vmatpush2.msra.mxu0 0.0
  %234 = vmatprep.subr.mxu0 0.0
  %235 = vmatpush2.msra.mxu0 0.0
  %236 = vmatprep.subr.mxu0 0.0
  %237 = vmatpush2.msra.mxu0 0.0
  %238 = vmatprep.subr.mxu0 0.0
  %239 = vmatpush2.msra.mxu0 0.0
  %240 = vmatprep.subr.mxu0 0.0
  %241 = vmatpush2.msra.mxu0 0.0
  %242 = vmatprep.mubr.f32.mxu0 0.0
  %243 = vmatmul.mubr.f32.gmra.mxu0 %v173
  %v244 = vpop.f32.mrf.mxu0
  %v245 = vadd.f32 %v170, %v244
  %v246 = vpop.f32.mrf.mxu0
  %247 = vmatprep.mubr.f32.mxu0 0.0
  %248 = vmatmul.mubr.f32.gmra.mxu0 %v176
  %v249 = vpop.f32.mrf.mxu0
  %v250 = vadd.f32 %v170, %v249
  %v251 = vpop.f32.mrf.mxu0
  %252 = vdwg.mxu0
  %vm253 = vcmask 31744
  %v254 = vsel %vm253, %v245, -inf
  %255 = vmax.xlane.f32.xlu0 %v254
  %v256 = vpop.xlane.xlu0 %255
  %v257 = vsel %vm253, %v250, -inf
  %258 = vmax.xlane.f32.xlu0 %v257
  %v259 = vpop.xlane.xlu0 %258
  %v260 = vsub.f32 %v245, %v256
  %v261 = vsub.f32 %v250, %v259
  %v262 = vmul.f32 %v260, 1.442695
  %v263 = vpow.pop %v262
  %v264 = vmul.f32 %v261, 1.442695
  %v265 = vpow.pop %v264
  %v266 = vsel %vm253, %v263, 0.0
  %267 = vadd.xlane.f32.xlu0 %v266
  %v268 = vpop.xlane.xlu0 %267
  %v269 = vsel %vm253, %v265, 0.0
  %270 = vadd.xlane.f32.xlu0 %v269
  %v271 = vpop.xlane.xlu0 %270
  %v272 = vrcp.pop %v268
  %v273 = vrcp.pop %v271
  %v274 = vmul.f32 %v263, %v272
  %v275 = vmul.f32 %v265, %v273
  %276 = vst.msk [vmem:[%s6] sm:$0xff] %vm253, %v274
  %277 = vst.msk [vmem:[%s6 + $0x8] sm:$0xff] %vm253, %v275
  %v278 = vmax.f32 %v245, 0.0
  %v279 = vmax.f32 %v250, 0.0
  %s280 = scalar_lea.vmem %s3, 32
  %v281 = vld [vmem:[%s280] sm:$0xff]
  %v282 = vld [vmem:[%s280 + $0x8] sm:$0xff]
  %v283 = vld [vmem:[%s280 + $0x10] sm:$0xff]
  %v284 = vld [vmem:[%s280 + $0x18] sm:$0xff]
  %s285 = scalar_lea.vmem %s4, 1
  %v286 = vld [vmem:[%s285] sm:$0x1]
  %v288 = vlaneseq
  %v289 = vshrl.u32 %v288, 7
  %v290 = vsub.s32 0, %v289
  %v291 = vrot.slane %v286, %v290
  %295 = vrot.lane.b32.xlu0 %v278, 124
  %v296 = vpop.permute.xlu0 %295
  %297 = vrot.lane.b32.xlu0 %v279, 124
  %v298 = vpop.permute.xlu0 %297
  %v299 = vsel %vm77, %v296, 0
  %v301 = vsel %vm77, %v298, 0
  %303 = vmatprep.subr.mxu0 0.0
  %304 = vmatpush1.msra.mxu0 0.0
  %305 = vmatprep.subr.mxu0 0.0
  %306 = vmatpush1.msra.mxu0 0.0
  %307 = vmatprep.subr.mxu0 0.0
  %308 = vmatpush1.msra.mxu0 0.0
  %309 = vmatprep.subr.mxu0 0.0
  %310 = vmatpush1.msra.mxu0 0.0
  %311 = vmatprep.subr.mxu0 0.0
  %312 = vmatpush1.msra.mxu0 0.0
  %313 = vmatprep.subr.mxu0 0.0
  %314 = vmatpush1.msra.mxu0 0.0
  %315 = vmatprep.subr.mxu0 0.0
  %316 = vmatpush1.msra.mxu0 0.0
  %317 = vmatprep.subr.mxu0 0.0
  %318 = vmatpush1.msra.mxu0 0.0
  %319 = vmatprep.subr.mxu0 0.0
  %320 = vmatpush1.msra.mxu0 0.0
  %321 = vmatprep.subr.mxu0 0.0
  %322 = vmatpush1.msra.mxu0 0.0
  %323 = vmatprep.subr.mxu0 0.0
  %324 = vmatpush1.msra.mxu0 0.0
  %325 = vmatprep.subr.mxu0 0.0
  %326 = vmatpush1.msra.mxu0 0.0
  %327 = vmatprep.subr.mxu0 0.0
  %328 = vmatpush1.msra.mxu0 %v284
  %329 = vmatprep.subr.mxu0 0.0
  %330 = vmatpush1.msra.mxu0 %v283
  %331 = vmatprep.subr.mxu0 0.0
  %332 = vmatpush1.msra.mxu0 %v282
  %333 = vmatprep.subr.mxu0 0.0
  %334 = vmatpush1.msra.mxu0 %v281
  %335 = vmatprep.subr.mxu0 0.0
  %336 = vmatpush2.msra.mxu0 0.0
  %337 = vmatprep.subr.mxu0 0.0
  %338 = vmatpush2.msra.mxu0 0.0
  %339 = vmatprep.subr.mxu0 0.0
  %340 = vmatpush2.msra.mxu0 0.0
  %341 = vmatprep.subr.mxu0 0.0
  %342 = vmatpush2.msra.mxu0 0.0
  %343 = vmatprep.subr.mxu0 0.0
  %344 = vmatpush2.msra.mxu0 0.0
  %345 = vmatprep.subr.mxu0 0.0
  %346 = vmatpush2.msra.mxu0 0.0
  %347 = vmatprep.subr.mxu0 0.0
  %348 = vmatpush2.msra.mxu0 0.0
  %349 = vmatprep.subr.mxu0 0.0
  %350 = vmatpush2.msra.mxu0 0.0
  %351 = vmatprep.subr.mxu0 0.0
  %352 = vmatpush2.msra.mxu0 0.0
  %353 = vmatprep.subr.mxu0 0.0
  %354 = vmatpush2.msra.mxu0 0.0
  %355 = vmatprep.subr.mxu0 0.0
  %356 = vmatpush2.msra.mxu0 0.0
  %357 = vmatprep.subr.mxu0 0.0
  %358 = vmatpush2.msra.mxu0 0.0
  %359 = vmatprep.subr.mxu0 0.0
  %360 = vmatpush2.msra.mxu0 0.0
  %361 = vmatprep.subr.mxu0 0.0
  %362 = vmatpush2.msra.mxu0 0.0
  %363 = vmatprep.subr.mxu0 0.0
  %364 = vmatpush2.msra.mxu0 0.0
  %365 = vmatprep.subr.mxu0 0.0
  %366 = vmatpush2.msra.mxu0 0.0
  %367 = vmatprep.mubr.f32.mxu0 0.0
  %368 = vmatmul.mubr.f32.gmra.mxu0 %v299
  %v369 = vpop.f32.mrf.mxu0
  %v370 = vadd.f32 %v291, %v369
  %v371 = vpop.f32.mrf.mxu0
  %372 = vmatprep.mubr.f32.mxu0 0.0
  %373 = vmatmul.mubr.f32.gmra.mxu0 %v301
  %v374 = vpop.f32.mrf.mxu0
  %v375 = vadd.f32 %v291, %v374
  %v376 = vpop.f32.mrf.mxu0
  %377 = vdwg.mxu0
  %v378 = vsel %vm253, %v370, -inf
  %379 = vmax.xlane.f32.xlu0 %v378
  %v380 = vpop.xlane.xlu0 %379
  %v381 = vsel %vm253, %v375, -inf
  %382 = vmax.xlane.f32.xlu0 %v381
  %v383 = vpop.xlane.xlu0 %382
  %v384 = vsub.f32 %v370, %v380
  %v385 = vsub.f32 %v375, %v383
  %v386 = vmul.f32 %v384, 1.442695
  %v387 = vpow.pop %v386
  %v388 = vmul.f32 %v385, 1.442695
  %v389 = vpow.pop %v388
  %v390 = vsel %vm253, %v387, 0.0
  %391 = vadd.xlane.f32.xlu0 %v390
  %v392 = vpop.xlane.xlu0 %391
  %v393 = vsel %vm253, %v389, 0.0
  %394 = vadd.xlane.f32.xlu0 %v393
  %v395 = vpop.xlane.xlu0 %394
  %v396 = vrcp.pop %v392
  %v397 = vrcp.pop %v395
  %v398 = vmul.f32 %v387, %v396
  %v399 = vmul.f32 %v389, %v397
  %402 = vrot.lane.b32.xlu0 %v398, 4
  %v403 = vpop.permute.xlu0 %402
  %404 = vrot.lane.b32.xlu0 %v399, 4
  %v405 = vpop.permute.xlu0 %404
  %vm408 = vcmask 64544
  %409 = vst.msk [vmem:[%s6] sm:$0xff] %vm408, %v403
  %410 = vst.msk [vmem:[%s6 + $0x8] sm:$0xff] %vm408, %v405
  %v411 = vmax.f32 %v370, 0.0
  %v412 = vmax.f32 %v375, 0.0
  %s413 = scalar_lea.vmem %s3, 64
  %v414 = vld [vmem:[%s413] sm:$0xff]
  %v415 = vld [vmem:[%s413 + $0x8] sm:$0xff]
  %v416 = vld [vmem:[%s413 + $0x10] sm:$0xff]
  %v417 = vld [vmem:[%s413 + $0x18] sm:$0xff]
  %s418 = scalar_lea.vmem %s4, 2
  %v419 = vld [vmem:[%s418] sm:$0x1]
  %v421 = vlaneseq
  %v422 = vshrl.u32 %v421, 7
  %v423 = vsub.s32 0, %v422
  %v424 = vrot.slane %v419, %v423
  %428 = vrot.lane.b32.xlu0 %v411, 124
  %v429 = vpop.permute.xlu0 %428
  %430 = vrot.lane.b32.xlu0 %v412, 124
  %v431 = vpop.permute.xlu0 %430
  %v432 = vsel %vm77, %v429, 0
  %v434 = vsel %vm77, %v431, 0
  %436 = vmatprep.subr.mxu0 0.0
  %437 = vmatpush1.msra.mxu0 0.0
  %438 = vmatprep.subr.mxu0 0.0
  %439 = vmatpush1.msra.mxu0 0.0
  %440 = vmatprep.subr.mxu0 0.0
  %441 = vmatpush1.msra.mxu0 0.0
  %442 = vmatprep.subr.mxu0 0.0
  %443 = vmatpush1.msra.mxu0 0.0
  %444 = vmatprep.subr.mxu0 0.0
  %445 = vmatpush1.msra.mxu0 0.0
  %446 = vmatprep.subr.mxu0 0.0
  %447 = vmatpush1.msra.mxu0 0.0
  %448 = vmatprep.subr.mxu0 0.0
  %449 = vmatpush1.msra.mxu0 0.0
  %450 = vmatprep.subr.mxu0 0.0
  %451 = vmatpush1.msra.mxu0 0.0
  %452 = vmatprep.subr.mxu0 0.0
  %453 = vmatpush1.msra.mxu0 0.0
  %454 = vmatprep.subr.mxu0 0.0
  %455 = vmatpush1.msra.mxu0 0.0
  %456 = vmatprep.subr.mxu0 0.0
  %457 = vmatpush1.msra.mxu0 0.0
  %458 = vmatprep.subr.mxu0 0.0
  %459 = vmatpush1.msra.mxu0 0.0
  %460 = vmatprep.subr.mxu0 0.0
  %461 = vmatpush1.msra.mxu0 %v417
  %462 = vmatprep.subr.mxu0 0.0
  %463 = vmatpush1.msra.mxu0 %v416
  %464 = vmatprep.subr.mxu0 0.0
  %465 = vmatpush1.msra.mxu0 %v415
  %466 = vmatprep.subr.mxu0 0.0
  %467 = vmatpush1.msra.mxu0 %v414
  %468 = vmatprep.subr.mxu0 0.0
  %469 = vmatpush2.msra.mxu0 0.0
  %470 = vmatprep.subr.mxu0 0.0
  %471 = vmatpush2.msra.mxu0 0.0
  %472 = vmatprep.subr.mxu0 0.0
  %473 = vmatpush2.msra.mxu0 0.0
  %474 = vmatprep.subr.mxu0 0.0
  %475 = vmatpush2.msra.mxu0 0.0
  %476 = vmatprep.subr.mxu0 0.0
  %477 = vmatpush2.msra.mxu0 0.0
  %478 = vmatprep.subr.mxu0 0.0
  %479 = vmatpush2.msra.mxu0 0.0
  %480 = vmatprep.subr.mxu0 0.0
  %481 = vmatpush2.msra.mxu0 0.0
  %482 = vmatprep.subr.mxu0 0.0
  %483 = vmatpush2.msra.mxu0 0.0
  %484 = vmatprep.subr.mxu0 0.0
  %485 = vmatpush2.msra.mxu0 0.0
  %486 = vmatprep.subr.mxu0 0.0
  %487 = vmatpush2.msra.mxu0 0.0
  %488 = vmatprep.subr.mxu0 0.0
  %489 = vmatpush2.msra.mxu0 0.0
  %490 = vmatprep.subr.mxu0 0.0
  %491 = vmatpush2.msra.mxu0 0.0
  %492 = vmatprep.subr.mxu0 0.0
  %493 = vmatpush2.msra.mxu0 0.0
  %494 = vmatprep.subr.mxu0 0.0
  %495 = vmatpush2.msra.mxu0 0.0
  %496 = vmatprep.subr.mxu0 0.0
  %497 = vmatpush2.msra.mxu0 0.0
  %498 = vmatprep.subr.mxu0 0.0
  %499 = vmatpush2.msra.mxu0 0.0
  %500 = vmatprep.mubr.f32.mxu0 0.0
  %501 = vmatmul.mubr.f32.gmra.mxu0 %v432
  %v502 = vpop.f32.mrf.mxu0
  %v503 = vadd.f32 %v424, %v502
  %v504 = vpop.f32.mrf.mxu0
  %505 = vmatprep.mubr.f32.mxu0 0.0
  %506 = vmatmul.mubr.f32.gmra.mxu0 %v434
  %v507 = vpop.f32.mrf.mxu0
  %v508 = vadd.f32 %v424, %v507
  %v509 = vpop.f32.mrf.mxu0
  %510 = vdwg.mxu0
  %v511 = vsel %vm253, %v503, -inf
  %512 = vmax.xlane.f32.xlu0 %v511
  %v513 = vpop.xlane.xlu0 %512
  %v514 = vsel %vm253, %v508, -inf
  %515 = vmax.xlane.f32.xlu0 %v514
  %v516 = vpop.xlane.xlu0 %515
  %v517 = vsub.f32 %v503, %v513
  %v518 = vsub.f32 %v508, %v516
  %v519 = vmul.f32 %v517, 1.442695
  %v520 = vpow.pop %v519
  %v521 = vmul.f32 %v518, 1.442695
  %v522 = vpow.pop %v521
  %v523 = vsel %vm253, %v520, 0.0
  %524 = vadd.xlane.f32.xlu0 %v523
  %v525 = vpop.xlane.xlu0 %524
  %v526 = vsel %vm253, %v522, 0.0
  %527 = vadd.xlane.f32.xlu0 %v526
  %v528 = vpop.xlane.xlu0 %527
  %v529 = vrcp.pop %v525
  %v530 = vrcp.pop %v528
  %v531 = vmul.f32 %v520, %v529
  %v532 = vmul.f32 %v522, %v530
  %535 = vrot.lane.b32.xlu0 %v531, 8
  %v536 = vpop.permute.xlu0 %535
  %537 = vrot.lane.b32.xlu0 %v532, 8
  %v538 = vpop.permute.xlu0 %537
  %vm541 = vcmask 97344
  %542 = vst.msk [vmem:[%s6] sm:$0xff] %vm541, %v536
  %543 = vst.msk [vmem:[%s6 + $0x8] sm:$0xff] %vm541, %v538
  %v544 = vmax.f32 %v503, 0.0
  %v545 = vmax.f32 %v508, 0.0
  %v546 = vld [vmem:[%s5] sm:$0xff]
  %v547 = vld [vmem:[%s5 + $0x8] sm:$0xff]
  %v548 = vld [vmem:[%s5 + $0x10] sm:$0xff]
  %v549 = vld [vmem:[%s5 + $0x18] sm:$0xff]
  %v550 = vld [vmem:[%s5 + $0x20] sm:$0x1]
  %v551 = vlaneseq
  %v552 = vshrl.u32 %v551, 7
  %v553 = vsub.s32 0, %v552
  %v554 = vrot.slane %v550, %v553
  %557 = vrot.lane.b32.xlu0 %v544, 124
  %v558 = vpop.permute.xlu0 %557
  %559 = vrot.lane.b32.xlu0 %v545, 124
  %v560 = vpop.permute.xlu0 %559
  %v561 = vsel %vm77, %v558, 0
  %v563 = vsel %vm77, %v560, 0
  %565 = vmatprep.subr.mxu0 0.0
  %566 = vmatpush1.msra.mxu0 0.0
  %567 = vmatprep.subr.mxu0 0.0
  %568 = vmatpush1.msra.mxu0 0.0
  %569 = vmatprep.subr.mxu0 0.0
  %570 = vmatpush1.msra.mxu0 0.0
  %571 = vmatprep.subr.mxu0 0.0
  %572 = vmatpush1.msra.mxu0 0.0
  %573 = vmatprep.subr.mxu0 0.0
  %574 = vmatpush1.msra.mxu0 0.0
  %575 = vmatprep.subr.mxu0 0.0
  %576 = vmatpush1.msra.mxu0 0.0
  %577 = vmatprep.subr.mxu0 0.0
  %578 = vmatpush1.msra.mxu0 0.0
  %579 = vmatprep.subr.mxu0 0.0
  %580 = vmatpush1.msra.mxu0 0.0
  %581 = vmatprep.subr.mxu0 0.0
  %582 = vmatpush1.msra.mxu0 0.0
  %583 = vmatprep.subr.mxu0 0.0
  %584 = vmatpush1.msra.mxu0 0.0
  %585 = vmatprep.subr.mxu0 0.0
  %586 = vmatpush1.msra.mxu0 0.0
  %587 = vmatprep.subr.mxu0 0.0
  %588 = vmatpush1.msra.mxu0 0.0
  %589 = vmatprep.subr.mxu0 0.0
  %590 = vmatpush1.msra.mxu0 %v549
  %591 = vmatprep.subr.mxu0 0.0
  %592 = vmatpush1.msra.mxu0 %v548
  %593 = vmatprep.subr.mxu0 0.0
  %594 = vmatpush1.msra.mxu0 %v547
  %595 = vmatprep.subr.mxu0 0.0
  %596 = vmatpush1.msra.mxu0 %v546
  %597 = vmatprep.subr.mxu0 0.0
  %598 = vmatpush2.msra.mxu0 0.0
  %599 = vmatprep.subr.mxu0 0.0
  %600 = vmatpush2.msra.mxu0 0.0
  %601 = vmatprep.subr.mxu0 0.0
  %602 = vmatpush2.msra.mxu0 0.0
  %603 = vmatprep.subr.mxu0 0.0
  %604 = vmatpush2.msra.mxu0 0.0
  %605 = vmatprep.subr.mxu0 0.0
  %606 = vmatpush2.msra.mxu0 0.0
  %607 = vmatprep.subr.mxu0 0.0
  %608 = vmatpush2.msra.mxu0 0.0
  %609 = vmatprep.subr.mxu0 0.0
  %610 = vmatpush2.msra.mxu0 0.0
  %611 = vmatprep.subr.mxu0 0.0
  %612 = vmatpush2.msra.mxu0 0.0
  %613 = vmatprep.subr.mxu0 0.0
  %614 = vmatpush2.msra.mxu0 0.0
  %615 = vmatprep.subr.mxu0 0.0
  %616 = vmatpush2.msra.mxu0 0.0
  %617 = vmatprep.subr.mxu0 0.0
  %618 = vmatpush2.msra.mxu0 0.0
  %619 = vmatprep.subr.mxu0 0.0
  %620 = vmatpush2.msra.mxu0 0.0
  %621 = vmatprep.subr.mxu0 0.0
  %622 = vmatpush2.msra.mxu0 0.0
  %623 = vmatprep.subr.mxu0 0.0
  %624 = vmatpush2.msra.mxu0 0.0
  %625 = vmatprep.subr.mxu0 0.0
  %626 = vmatpush2.msra.mxu0 0.0
  %627 = vmatprep.subr.mxu0 0.0
  %628 = vmatpush2.msra.mxu0 0.0
  %629 = vmatprep.mubr.f32.mxu0 0.0
  %630 = vmatmul.mubr.f32.gmra.mxu0 %v561
  %v631 = vpop.f32.mrf.mxu0
  %v632 = vadd.f32 %v554, %v631
  %v633 = vpop.f32.mrf.mxu0
  %634 = vmatprep.mubr.f32.mxu0 0.0
  %635 = vmatmul.mubr.f32.gmra.mxu0 %v563
  %v636 = vpop.f32.mrf.mxu0
  %v637 = vadd.f32 %v554, %v636
  %v638 = vpop.f32.mrf.mxu0
  %639 = vdwg.mxu0
  %v640 = vsel %vm253, %v632, -inf
  %641 = vmax.xlane.f32.xlu0 %v640
  %v642 = vpop.xlane.xlu0 %641
  %v643 = vsel %vm253, %v637, -inf
  %644 = vmax.xlane.f32.xlu0 %v643
  %v645 = vpop.xlane.xlu0 %644
  %v646 = vsub.f32 %v632, %v642
  %v647 = vsub.f32 %v637, %v645
  %v648 = vmul.f32 %v646, 1.442695
  %v649 = vpow.pop %v648
  %v650 = vmul.f32 %v647, 1.442695
  %v651 = vpow.pop %v650
  %v652 = vsel %vm253, %v649, 0.0
  %653 = vadd.xlane.f32.xlu0 %v652
  %v654 = vpop.xlane.xlu0 %653
  %v655 = vsel %vm253, %v651, 0.0
  %656 = vadd.xlane.f32.xlu0 %v655
  %v657 = vpop.xlane.xlu0 %656
  %v658 = vrcp.pop %v654
  %v659 = vrcp.pop %v657
  %v660 = vmul.f32 %v649, %v658
  %v661 = vmul.f32 %v651, %v659
  %664 = vrot.lane.b32.xlu0 %v660, 12
  %v665 = vpop.permute.xlu0 %664
  %666 = vrot.lane.b32.xlu0 %v661, 12
  %v667 = vpop.permute.xlu0 %666
  %vm670 = vcmask 130144
  %671 = vst.msk [vmem:[%s6] sm:$0xff] %vm670, %v665
  %672 = vst.msk [vmem:[%s6 + $0x8] sm:$0xff] %vm670, %v667
  // Predicated region
  $region26: #{model_bilinear_forward.1} parent=0 // pred_check
    _
  $region27: #{model_bilinear_forward.1} parent=0 // pred_check_branch
    %674 = sbr.rel (0) target = $region29
  $region28: #{model_bilinear_forward.1} parent=0 // pred_region
    _
  $region29: #{model_bilinear_forward.1} parent=0 // pred_fallthru
    _
  // Predicated region
  $region30: #{model_bilinear_forward.1} parent=0 // pred_check
    _
  $region31: #{model_bilinear_forward.1} parent=0 // pred_check_branch
    %676 = sbr.rel (0) target = $region33
  $region32: #{model_bilinear_forward.1} parent=0 // pred_region
    _
  $region33: #{model_bilinear_forward.1} parent=0 // pred_fallthru
    _

</llo_original>
